<compile_context>
chip_gen: v7x
topology: tpu7x:2x2x1
jax: 0.10.0
libtpu: 0.0.40
codegen_flags: <defaults>
</compile_context>

<pallas_src>
import jax
import jax.numpy as jnp
from jax import lax
from jax.experimental import pallas as pl
from jax.experimental.pallas import tpu as pltpu


def _output_layer_kernel(x_ref, w_ref, b_ref, o_ref):
    # x_ref: (TB, F)   w_ref: (Cp, F)  [PyTorch (out, in) layout, zero-padded]
    # b_ref: (1, Cp)   o_ref: (TB, Cp)
    x = jnp.maximum(x_ref[...], 0.0)                      # ReLU (VPU)
    # F.dropout in eval mode is identity -> nothing to do here.
    # (TB, F) x (Cp, F) contracting dim 1 of both -> (TB, Cp) on the MXU.
    acc = lax.dot_general(
        x, w_ref[...],
        dimension_numbers=(((1,), (1,)), ((), ())),
        preferred_element_type=jnp.float32)
    o_ref[...] = (acc + b_ref[...]).astype(o_ref.dtype)   # bias add (VPU)


def output_layer_forward(feat, weight, bias):
    """feat: (B, num_feat), weight: (num_classes, num_feat) [PyTorch layout],
    bias: (num_classes,). Returns (B, num_classes)."""
    B, F = feat.shape
    C = weight.shape[0]

    # Lane-dense class dimension: pad C up to a multiple of 128 with zeros.
    Cp = ((C + 127) // 128) * 128
    if Cp != C:
        w_p = jnp.pad(weight, ((0, Cp - C), (0, 0)))
        b_p = jnp.pad(bias, (0, Cp - C))
    else:
        w_p, b_p = weight, bias
    b2d = b_p.reshape(1, Cp)

    # Batch tile: up to 512 rows per grid step. TB==B (full dim) is always a
    # legal block; 512 is a multiple of 8 so large batches tile densely.
    TB = 512 if B >= 512 else B
    grid = (pl.cdiv(B, TB),)

    out_padded = pl.pallas_call(
        _output_layer_kernel,
        out_shape=jax.ShapeDtypeStruct((B, Cp), feat.dtype),
        grid=grid,
        in_specs=[
            pl.BlockSpec((TB, F), lambda i: (i, 0)),   # streamed per tile
            pl.BlockSpec((Cp, F), lambda i: (0, 0)),   # resident weight
            pl.BlockSpec((1, Cp), lambda i: (0, 0)),   # resident bias
        ],
        out_specs=pl.BlockSpec((TB, Cp), lambda i: (i, 0)),
        compiler_params=pltpu.CompilerParams(
            dimension_semantics=("parallel",)),
    )(feat, w_p, b2d)

    return out_padded[:, :C] if Cp != C else out_padded


if __name__ == "__main__":
    # Small shapes consistent with the module: num_feat=32, num_classes=8, batch=8
    B, num_feat, num_classes = 8, 32, 8

    key = jax.random.PRNGKey(0)
    k_feat, k_w, k_b = jax.random.split(key, 3)

    feat = jax.random.normal(k_feat, (B, num_feat), dtype=jnp.float32)

    # Deterministic parameter init (mimics nn.Linear's uniform(-1/sqrt(F), 1/sqrt(F)))
    bound = 1.0 / jnp.sqrt(jnp.float32(num_feat))
    weight = jax.random.uniform(k_w, (num_classes, num_feat),
                                minval=-bound, maxval=bound, dtype=jnp.float32)
    bias = jax.random.uniform(k_b, (num_classes,),
                              minval=-bound, maxval=bound, dtype=jnp.float32)

    fwd = jax.jit(output_layer_forward)
    out = fwd(feat, weight, bias)
    out = jax.block_until_ready(out)

    # Reference check (pure JAX): relu -> linear (eval-mode dropout = identity)
    ref = jnp.maximum(feat, 0.0) @ weight.T + bias
    assert out.shape == (B, num_classes)
    assert jnp.allclose(out, ref, atol=1e-5, rtol=1e-5)

    print("KERNEL_OK")
</pallas_src>

<mosaic_0001>
module attributes {stable_mosaic.version = 11 : i64} {
  func.func @_output_layer_kernel(%arg0: i32, %arg1: memref<8x32xf32, #tpu.memory_space<vmem>>, %arg2: memref<128x32xf32, #tpu.memory_space<vmem>>, %arg3: memref<1x128xf32, #tpu.memory_space<vmem>>, %arg4: memref<8x128xf32, #tpu.memory_space<vmem>>) attributes {dimension_semantics = [#tpu.dimension_semantics<parallel>], iteration_bounds = array<i64: 1>, scalar_prefetch = 0 : i64, scratch_operands = 0 : i64, tpu.core_type = #tpu.core_type<tc>, window_params = [{transform_indices = @transform_0, window_bounds = array<i64: 8, 32>}, {pipeline_mode = #tpu.pipeline_mode<synchronous>, transform_indices = @transform_1, window_bounds = array<i64: 128, 32>}, {pipeline_mode = #tpu.pipeline_mode<synchronous>, transform_indices = @transform_2, window_bounds = array<i64: 1, 128>}, {transform_indices = @transform_3, window_bounds = array<i64: 8, 128>}]} {
    %c0 = arith.constant 0 : index
    %c0_0 = arith.constant 0 : index
    %0 = vector.load %arg1[%c0, %c0_0] : memref<8x32xf32, #tpu.memory_space<vmem>>, vector<8x32xf32>
    %cst = arith.constant 0.000000e+00 : f32
    %1 = vector.broadcast %cst : f32 to vector<8x32xf32>
    %2 = arith.maximumf %0, %1 : vector<8x32xf32>
    %c0_1 = arith.constant 0 : index
    %c0_2 = arith.constant 0 : index
    %3 = vector.load %arg2[%c0_1, %c0_2] : memref<128x32xf32, #tpu.memory_space<vmem>>, vector<128x32xf32>
    %cst_3 = arith.constant dense<0.000000e+00> : vector<8x128xf32>
    %4 = tpu.matmul %2, %3, %cst_3 {dimension_numbers = #tpu.dot_dimension_numbers<[1], [1], [0], [0], [0, 0, 1, 0], [], []>} : vector<8x32xf32>, vector<128x32xf32>, vector<8x128xf32> -> vector<8x128xf32>
    %c0_4 = arith.constant 0 : index
    %c0_5 = arith.constant 0 : index
    %5 = vector.load %arg3[%c0_4, %c0_5] : memref<1x128xf32, #tpu.memory_space<vmem>>, vector<1x128xf32>
    %6 = vector.broadcast %5 : vector<1x128xf32> to vector<8x128xf32>
    %7 = arith.addf %4, %6 : vector<8x128xf32>
    %c0_6 = arith.constant 0 : index
    %c0_7 = arith.constant 0 : index
    %8 = vector.load %arg4[%c0_6, %c0_7] : memref<8x128xf32, #tpu.memory_space<vmem>>, vector<8x128xf32>
    tpu.vector_store %arg4[%c0_6, %c0_7], %7 {strides = array<i32>} : memref<8x128xf32, #tpu.memory_space<vmem>>, vector<8x128xf32>,
    return
  }
  func.func @transform_0(%arg0: i32) -> (i32, i32) {
    %c0_i32 = arith.constant 0 : i32
    %c0_i32_0 = arith.constant 0 : i32
    return %arg0, %c0_i32 : i32, i32
  }
  func.func @transform_1(%arg0: i32) -> (i32, i32) {
    %c0_i32 = arith.constant 0 : i32
    %c0_i32_0 = arith.constant 0 : i32
    %c0_i32_1 = arith.constant 0 : i32
    return %c0_i32, %c0_i32_0 : i32, i32
  }
  func.func @transform_2(%arg0: i32) -> (i32, i32) {
    %c0_i32 = arith.constant 0 : i32
    %c0_i32_0 = arith.constant 0 : i32
    %c0_i32_1 = arith.constant 0 : i32
    return %c0_i32, %c0_i32_0 : i32, i32
  }
  func.func @transform_3(%arg0: i32) -> (i32, i32) {
    %c0_i32 = arith.constant 0 : i32
    %c0_i32_0 = arith.constant 0 : i32
    return %arg0, %c0_i32 : i32, i32
  }
}

</mosaic_0001>

<llo_original>
// kernel: output_layer_forward.1
$region0: #{output_layer_forward.1}
  #allocation0 [shape = 'u32[]', space=smem, size = 0x4, offset = 0x4, fixed_abs, tag = 'smem constant byte address 0x4 - core index']
  #allocation1 [shape = 'u32[144,128]{1,0:T(1,128)}', space=vmem, size = 0x12000, scoped, tag = 'internal scratch']
  %s0 = inlined_call_operand.vmem [shape: f32[8,32], index: 0, kind: input, shape index: {}]
  %s1 = inlined_call_operand.vmem [shape: f32[128,32], index: 1, kind: input, shape index: {}]
  %s2 = inlined_call_operand.vmem [shape: f32[1,128], index: 2, kind: input, shape index: {}]
  %s3 = inlined_call_operand.hbm [shape: f32[8,128], index: 3, kind: output, shape index: {}]
  %s4 = sld [smem:[#allocation0]]
  $region22: #{output_layer_forward.1} parent=0
    _
  %s6 = ssub.s32 1, %s4
  %s7 = scalar_select 0, %s6, %s4
  $region1: #{output_layer_forward.1} parent=0
    #allocation2 [shape = 'u8[4096]{0}', space=vmem, size = 0x1000, scoped, tag = 'output window, operand 0, single buffered']
    #allocation3 [shape = 's32[1]{0}', space=sflag, size = 0x4, scoped, tag = 'scoped memory for output_layer_forward.1']
    %8 = vsyncpa [#allocation3], 0
    // Predicated region
    $region2: #{output_layer_forward.1} parent=1 // pred_check
      _
    $region3: #{output_layer_forward.1} parent=1 // pred_check_branch
      %10 = sbr.rel (0) target = $region5
    $region4: #{output_layer_forward.1} parent=1 // pred_region
      _
    $region5: #{output_layer_forward.1} parent=1 // pred_fallthru
      _
    // Predicated region
    $region6: #{output_layer_forward.1} parent=1 // pred_check
      _
    $region7: #{output_layer_forward.1} parent=1 // pred_check_branch
      %12 = sbr.rel (0) target = $region9
    $region8: #{output_layer_forward.1} parent=1 // pred_region
      _
    $region9: #{output_layer_forward.1} parent=1 // pred_fallthru
      _
    // Predicated region
    $region10: #{output_layer_forward.1} parent=1 // pred_check
      _
    $region11: #{output_layer_forward.1} parent=1 // pred_check_branch
      %14 = sbr.rel (0) target = $region13
    $region12: #{output_layer_forward.1} parent=1 // pred_region
      _
    $region13: #{output_layer_forward.1} parent=1 // pred_fallthru
      _
    %v15 = vld [vmem:[%s0] sm:$0xff]
    %v16 = vmax.f32 %v15, 0.0
    %v17 = vld [vmem:[%s1] sm:$0xff]
    %v18 = vld [vmem:[%s1 + $0x8] sm:$0xff]
    %v19 = vld [vmem:[%s1 + $0x10] sm:$0xff]
    %v20 = vld [vmem:[%s1 + $0x18] sm:$0xff]
    %v21 = vld [vmem:[%s1 + $0x20] sm:$0xff]
    %v22 = vld [vmem:[%s1 + $0x28] sm:$0xff]
    %v23 = vld [vmem:[%s1 + $0x30] sm:$0xff]
    %v24 = vld [vmem:[%s1 + $0x38] sm:$0xff]
    %v25 = vld [vmem:[%s1 + $0x40] sm:$0xff]
    %v26 = vld [vmem:[%s1 + $0x48] sm:$0xff]
    %v27 = vld [vmem:[%s1 + $0x50] sm:$0xff]
    %v28 = vld [vmem:[%s1 + $0x58] sm:$0xff]
    %v29 = vld [vmem:[%s1 + $0x60] sm:$0xff]
    %v30 = vld [vmem:[%s1 + $0x68] sm:$0xff]
    %v31 = vld [vmem:[%s1 + $0x70] sm:$0xff]
    %v32 = vld [vmem:[%s1 + $0x78] sm:$0xff]
    %v33 = vld [vmem:[%s2] sm:$0x1]
    %v35 = vlaneseq
    %v36 = vshrl.u32 %v35, 7
    %v37 = vsub.s32 0, %v36
    %v38 = vrot.slane %v33, %v37
    %vm40 = vcmask 261120
    %v42 = vsel %vm40, %v16, 0
    %v45 = vsel %vm40, %v17, 0
    %v48 = vsel %vm40, %v18, 0
    %v51 = vsel %vm40, %v19, 0
    %v54 = vsel %vm40, %v20, 0
    %v57 = vsel %vm40, %v21, 0
    %v60 = vsel %vm40, %v22, 0
    %v63 = vsel %vm40, %v23, 0
    %v66 = vsel %vm40, %v24, 0
    %v69 = vsel %vm40, %v25, 0
    %v72 = vsel %vm40, %v26, 0
    %v75 = vsel %vm40, %v27, 0
    %v78 = vsel %vm40, %v28, 0
    %v81 = vsel %vm40, %v29, 0
    %v84 = vsel %vm40, %v30, 0
    %v87 = vsel %vm40, %v31, 0
    %v90 = vsel %vm40, %v32, 0
    %92 = vmatprep.subr.mxu0 0.0
    %93 = vmatpush1.xpose.msra.mxu0 %v45
    %94 = vmatprep.subr.mxu0 0.0
    %95 = vmatpush1.xpose.msra.mxu0 %v48
    %96 = vmatprep.subr.mxu0 0.0
    %97 = vmatpush1.xpose.msra.mxu0 %v51
    %98 = vmatprep.subr.mxu0 0.0
    %99 = vmatpush1.xpose.msra.mxu0 %v54
    %100 = vmatprep.subr.mxu0 0.0
    %101 = vmatpush1.xpose.msra.mxu0 %v57
    %102 = vmatprep.subr.mxu0 0.0
    %103 = vmatpush1.xpose.msra.mxu0 %v60
    %104 = vmatprep.subr.mxu0 0.0
    %105 = vmatpush1.xpose.msra.mxu0 %v63
    %106 = vmatprep.subr.mxu0 0.0
    %107 = vmatpush1.xpose.msra.mxu0 %v66
    %108 = vmatprep.subr.mxu0 0.0
    %109 = vmatpush1.xpose.msra.mxu0 %v69
    %110 = vmatprep.subr.mxu0 0.0
    %111 = vmatpush1.xpose.msra.mxu0 %v72
    %112 = vmatprep.subr.mxu0 0.0
    %113 = vmatpush1.xpose.msra.mxu0 %v75
    %114 = vmatprep.subr.mxu0 0.0
    %115 = vmatpush1.xpose.msra.mxu0 %v78
    %116 = vmatprep.subr.mxu0 0.0
    %117 = vmatpush1.xpose.msra.mxu0 %v81
    %118 = vmatprep.subr.mxu0 0.0
    %119 = vmatpush1.xpose.msra.mxu0 %v84
    %120 = vmatprep.subr.mxu0 0.0
    %121 = vmatpush1.xpose.msra.mxu0 %v87
    %122 = vmatprep.subr.mxu0 0.0
    %123 = vmatpush1.xpose.msra.mxu0 %v90
    %124 = vmatprep.subr.mxu0 0.0
    %125 = vmatpush1.xpose.msra.mxu0 0.0
    %126 = vmatprep.subr.mxu0 0.0
    %127 = vmatpush1.xpose.msra.mxu0 0.0
    %128 = vmatprep.subr.mxu0 0.0
    %129 = vmatpush1.xpose.msra.mxu0 0.0
    %130 = vmatprep.subr.mxu0 0.0
    %131 = vmatpush1.xpose.msra.mxu0 0.0
    %132 = vmatprep.subr.mxu0 0.0
    %133 = vmatpush1.xpose.msra.mxu0 0.0
    %134 = vmatprep.subr.mxu0 0.0
    %135 = vmatpush1.xpose.msra.mxu0 0.0
    %136 = vmatprep.subr.mxu0 0.0
    %137 = vmatpush1.xpose.msra.mxu0 0.0
    %138 = vmatprep.subr.mxu0 0.0
    %139 = vmatpush1.xpose.msra.mxu0 0.0
    %140 = vmatprep.subr.mxu0 0.0
    %141 = vmatpush1.xpose.msra.mxu0 0.0
    %142 = vmatprep.subr.mxu0 0.0
    %143 = vmatpush1.xpose.msra.mxu0 0.0
    %144 = vmatprep.subr.mxu0 0.0
    %145 = vmatpush1.xpose.msra.mxu0 0.0
    %146 = vmatprep.subr.mxu0 0.0
    %147 = vmatpush1.xpose.msra.mxu0 0.0
    %148 = vmatprep.subr.mxu0 0.0
    %149 = vmatpush1.xpose.msra.mxu0 0.0
    %150 = vmatprep.subr.mxu0 0.0
    %151 = vmatpush1.xpose.msra.mxu0 0.0
    %152 = vmatprep.subr.mxu0 0.0
    %153 = vmatpush1.xpose.msra.mxu0 0.0
    %154 = vmatprep.subr.mxu0 0.0
    %155 = vmatpush1.xpose.msra.mxu0 0.0
    %156 = vmatprep.mubr.f32.mxu0 0.0
    %157 = vmatmul.mubr.f32.gmra.mrb[0].mxu0 %v42
    %v158 = vpop.f32.mrb[0].mxu0
    %v159 = vadd.f32 %v38, %v158
    %v160 = vpop.f32.mrb[0].mxu0
    %161 = vdwg.mxu0
    %162 = vst [vmem:[#allocation2] sm:$0xff] %v159
    // Predicated region
    $region14: #{output_layer_forward.1} parent=1 // pred_check
      _
    $region15: #{output_layer_forward.1} parent=1 // pred_check_branch
      %164 = sbr.rel (0) target = $region17
    $region16: #{output_layer_forward.1} parent=1 // pred_region
      %s166 = ssub.s32 128, 128
      %167 = vsyncadd [#allocation3], %s166
      %s169 = sshll.u32 [#allocation2], 4
      %s170 = int_to_ptr.vmem [resolvable:$true] %s169
      %172 = dma.vmem_to_hbm [thread:$0]  %s170, 128, %s3, [#allocation3]
    $region17: #{output_layer_forward.1} parent=1 // pred_fallthru
      _
    // Predicated region
    $region18: #{output_layer_forward.1} parent=1 // pred_check
      _
    $region19: #{output_layer_forward.1} parent=1 // pred_check_branch
      %174 = sbr.rel (0) target = $region21
    $region20: #{output_layer_forward.1} parent=1 // pred_region
      %175 = dma.done [#allocation3], 128
    $region21: #{output_layer_forward.1} parent=1 // pred_fallthru
      _
    %176 = vsyncpa [#allocation3], 1

</llo_original>
